<compile_context>
chip_gen: v6e
topology: v6e:2x2x1
jax: 0.10.0
libtpu: 0.0.40
codegen_flags: <defaults>
</compile_context>

<pallas_src>
import functools

import jax
import jax.numpy as jnp
from jax.experimental import pallas as pl
from jax.experimental.pallas import tpu as pltpu


def _round_up(x, m):
    return ((x + m - 1) // m) * m


def cls_head_kernel(x_ref, w1_ref, b1_ref, w2_ref, b2_ref, out_ref, acc_ref):
    # x_ref:   [tm, tk]  f32 activation tile (CLS rows, flattened over B*C)
    # w1_ref:  [tk, H]   bf16 first Linear weight tile ([in, out] layout)
    # b1_ref:  [1, H]    f32 first Linear bias
    # w2_ref:  [1, H]    f32 second Linear weight as a broadcast row (H -> 1)
    # b2_ref:  [1]       f32 second Linear bias (SMEM scalar)
    # out_ref: [tm, 1]   f32 logits tile
    # acc_ref: [tm, H]   f32 accumulator scratch (lives across the K grid axis)
    k = pl.program_id(1)

    @pl.when(k == 0)
    def _():
        acc_ref[...] = jnp.zeros_like(acc_ref)

    # Linear(H, H): bf16 MXU matmul with f32 accumulation, K tiled via the grid.
    acc_ref[...] += jnp.dot(
        x_ref[...].astype(jnp.bfloat16),
        w1_ref[...],
        preferred_element_type=jnp.float32,
    )

    @pl.when(k == pl.num_programs(1) - 1)
    def _():
        # Epilogue in f32: bias + tanh (EUP), then Linear(H, 1) as a VPU multiply
        # + lane reduction (avoids an N=1 MXU matmul).
        h = jnp.tanh(acc_ref[...] + b1_ref[...])                          # [tm, H]
        logits = jnp.sum(h * w2_ref[...], axis=-1, keepdims=True)         # [tm, 1]
        out_ref[...] = logits + b2_ref[0]


def multi_cls_classifier_forward(last_hidden_state, params, num_classes,
                                 *, tile_m=256, tile_k=512):
    """logits = classifier(last_hidden_state[:, 1:1+num_classes, :]).squeeze(-1)"""
    B, S, H = last_hidden_state.shape
    C = num_classes
    assert S >= 1 + C, "sequence too short for num_classes CLS tokens"

    w1, b1, w2, b2 = params            # [H,H], [H], [H,1], [1]

    # Slice the C CLS rows in the wrapper: the unaligned sequence offset (start=1)
    # stays at the XLA level where arbitrary element offsets are free, and only
    # B*C*H elements ever reach HBM->VMEM DMA (not B*S*H).
    x = last_hidden_state[:, 1:1 + C, :].reshape(B * C, H).astype(jnp.float32)
    M = B * C

    # Tile sizes: M tile ~256 (good for the 2x256 MXU on v6e/v7x, fine on v5e),
    # K tile bounds the bf16 w1 working set for large H (v7x 64 MiB VMEM).
    tm = min(tile_m, _round_up(M, 8))
    tk = tile_k if (H > tile_k and H % tile_k == 0) else H
    grid_m = pl.cdiv(M, tm)
    grid_k = H // tk
    m_pad = grid_m * tm
    if m_pad != M:
        x = jnp.pad(x, ((0, m_pad - M), (0, 0)))

    # Weights: bf16 for the matmul operand, f32 for everything touched by VPU/EUP.
    w1_bf16 = w1.astype(jnp.bfloat16)                # [H, H]
    b1_2d = b1.reshape(1, H).astype(jnp.float32)     # [1, H]
    w2_row = w2.reshape(1, H).astype(jnp.float32)    # [1, H]
    b2_s = b2.reshape(1).astype(jnp.float32)         # [1]  (SMEM)

    flops = 2 * M * H * H + 3 * M * H
    bytes_accessed = 4 * M * H + 2 * H * H + 4 * 2 * H + 4 + 4 * M
    cost = pl.CostEstimate(flops=flops, transcendentals=M * H,
                           bytes_accessed=bytes_accessed)

    # TODO(synk): for very large H on v7x, also raise vmem_limit_bytes (with
    # headroom) via pltpu.CompilerParams; defaults are ample at these shapes.
    out = pl.pallas_call(
        cls_head_kernel,
        out_shape=jax.ShapeDtypeStruct((m_pad, 1), jnp.float32),
        grid_spec=pltpu.PrefetchScalarGridSpec(
            num_scalar_prefetch=0,
            grid=(grid_m, grid_k),                                   # K (reduction) last
            in_specs=[
                pl.BlockSpec((tm, tk), lambda i, k: (i, k)),         # x tile
                pl.BlockSpec((tk, H), lambda i, k: (k, 0)),          # w1 tile (bf16)
                pl.BlockSpec((1, H), lambda i, k: (0, 0)),           # b1 (resident)
                pl.BlockSpec((1, H), lambda i, k: (0, 0)),           # w2 row (resident)
                pl.BlockSpec(memory_space=pltpu.MemorySpace.SMEM),   # b2 scalar
            ],
            out_specs=pl.BlockSpec((tm, 1), lambda i, k: (i, 0)),
            scratch_shapes=[pltpu.VMEM((tm, H), jnp.float32)],
        ),
        compiler_params=pltpu.CompilerParams(
            dimension_semantics=("parallel", "arbitrary")),
        cost_estimate=cost,
    )(x, w1_bf16, b1_2d, w2_row, b2_s)

    # squeeze(-1) + unflatten(B, C): free metadata reshape at the XLA level.
    return out[:M, 0].reshape(B, C)


def reference_forward(last_hidden_state, params, num_classes):
    w1, b1, w2, b2 = params
    cls_emb = last_hidden_state[:, 1:1 + num_classes, :]
    h = jnp.tanh(cls_emb @ w1 + b1)
    return (h @ w2 + b2).squeeze(-1)


def init_params(key, hidden_size):
    # Deterministic synthetic init (shapes match nn.Linear(H,H) and nn.Linear(H,1),
    # stored transposed: [in, out]).
    k1, k2, k3, k4 = jax.random.split(key, 4)
    scale1 = 1.0 / jnp.sqrt(hidden_size)
    w1 = jax.random.uniform(k1, (hidden_size, hidden_size), jnp.float32, -scale1, scale1)
    b1 = jax.random.uniform(k2, (hidden_size,), jnp.float32, -scale1, scale1)
    w2 = jax.random.uniform(k3, (hidden_size, 1), jnp.float32, -scale1, scale1)
    b2 = jax.random.uniform(k4, (1,), jnp.float32, -scale1, scale1)
    return w1, b1, w2, b2


if __name__ == "__main__":
    B, S, H = 2, 8, 32        # batch, sequence length, hidden size
    num_classes = 4

    key = jax.random.PRNGKey(0)
    k_hid, k_params = jax.random.split(key)

    # Synthetic stand-in for base_model(input_ids, attention_mask).last_hidden_state
    last_hidden_state = jax.random.normal(k_hid, (B, S, H), dtype=jnp.float32)
    params = init_params(k_params, H)

    logits = multi_cls_classifier_forward(last_hidden_state, params, num_classes)
    logits = jax.block_until_ready(logits)

    ref = reference_forward(last_hidden_state, params, num_classes)
    assert logits.shape == (B, num_classes)
    # Tolerance loosened vs. pure-f32 because the H->H matmul runs in bf16 on the MXU.
    assert jnp.allclose(logits, ref, atol=3e-2, rtol=3e-2)

    print("KERNEL_OK")
</pallas_src>

<mosaic_0001>
module attributes {stable_mosaic.version = 11 : i64} {
  func.func @cls_head_kernel(%arg0: i32, %arg1: i32, %arg2: memref<8x32xf32, #tpu.memory_space<vmem>>, %arg3: memref<32x32xbf16, #tpu.memory_space<vmem>>, %arg4: memref<1x32xf32, #tpu.memory_space<vmem>>, %arg5: memref<1x32xf32, #tpu.memory_space<vmem>>, %arg6: memref<1xf32, #tpu.memory_space<smem>>, %arg7: memref<8x1xf32, #tpu.memory_space<vmem>>, %arg8: memref<8x32xf32, #tpu.memory_space<vmem>>) attributes {dimension_semantics = [#tpu.dimension_semantics<parallel>, #tpu.dimension_semantics<arbitrary>], iteration_bounds = array<i64: 1, 1>, scalar_prefetch = 0 : i64, scratch_operands = 1 : i64, tpu.core_type = #tpu.core_type<tc>, window_params = [{transform_indices = @transform_0, window_bounds = array<i64: 8, 32>}, {transform_indices = @transform_1, window_bounds = array<i64: 32, 32>}, {pipeline_mode = #tpu.pipeline_mode<synchronous>, transform_indices = @transform_2, window_bounds = array<i64: 1, 32>}, {pipeline_mode = #tpu.pipeline_mode<synchronous>, transform_indices = @transform_3, window_bounds = array<i64: 1, 32>}, {transform_indices = @transform_4, window_bounds = array<i64: 1>}, {transform_indices = @transform_5, window_bounds = array<i64: 8, 1>}]} {
    %c0_i32 = arith.constant 0 : i32
    %0 = arith.cmpi eq, %arg1, %c0_i32 : i32
    %1 = arith.extui %0 : i1 to i32
    %c0_i32_0 = arith.constant 0 : i32
    %2 = arith.cmpi ne, %1, %c0_i32_0 : i32
    scf.if %2 {
      %cst_10 = arith.constant 0.000000e+00 : f32
      %13 = vector.broadcast %cst_10 : f32 to vector<8x32xf32>
      %c0_11 = arith.constant 0 : index
      %c0_12 = arith.constant 0 : index
      %14 = vector.load %arg8[%c0_11, %c0_12] : memref<8x32xf32, #tpu.memory_space<vmem>>, vector<8x32xf32>
      tpu.vector_store %arg8[%c0_11, %c0_12], %13 {strides = array<i32>} : memref<8x32xf32, #tpu.memory_space<vmem>>, vector<8x32xf32>,
    } else {
    }
    %c0 = arith.constant 0 : index
    %c0_1 = arith.constant 0 : index
    %3 = vector.load %arg8[%c0, %c0_1] : memref<8x32xf32, #tpu.memory_space<vmem>>, vector<8x32xf32>
    %c0_2 = arith.constant 0 : index
    %c0_3 = arith.constant 0 : index
    %4 = vector.load %arg2[%c0_2, %c0_3] : memref<8x32xf32, #tpu.memory_space<vmem>>, vector<8x32xf32>
    %5 = arith.truncf %4 : vector<8x32xf32> to vector<8x32xbf16>
    %c0_4 = arith.constant 0 : index
    %c0_5 = arith.constant 0 : index
    %6 = vector.load %arg3[%c0_4, %c0_5] : memref<32x32xbf16, #tpu.memory_space<vmem>>, vector<32x32xbf16>
    %cst = arith.constant dense<0.000000e+00> : vector<8x32xf32>
    %7 = tpu.matmul %5, %6, %cst {dimension_numbers = #tpu.dot_dimension_numbers<[1], [0], [0], [1], [0, 0, 1, 1], [], []>} : vector<8x32xbf16>, vector<32x32xbf16>, vector<8x32xf32> -> vector<8x32xf32>
    %8 = arith.addf %3, %7 : vector<8x32xf32>
    %c0_6 = arith.constant 0 : index
    %c0_7 = arith.constant 0 : index
    %9 = vector.load %arg8[%c0_6, %c0_7] : memref<8x32xf32, #tpu.memory_space<vmem>>, vector<8x32xf32>
    tpu.vector_store %arg8[%c0_6, %c0_7], %8 {strides = array<i32>} : memref<8x32xf32, #tpu.memory_space<vmem>>, vector<8x32xf32>,
    %c0_i32_8 = arith.constant 0 : i32
    %10 = arith.cmpi eq, %arg1, %c0_i32_8 : i32
    %11 = arith.extui %10 : i1 to i32
    %c0_i32_9 = arith.constant 0 : i32
    %12 = arith.cmpi ne, %11, %c0_i32_9 : i32
    scf.if %12 {
      %c0_10 = arith.constant 0 : index
      %c0_11 = arith.constant 0 : index
      %13 = vector.load %arg8[%c0_10, %c0_11] : memref<8x32xf32, #tpu.memory_space<vmem>>, vector<8x32xf32>
      %c0_12 = arith.constant 0 : index
      %c0_13 = arith.constant 0 : index
      %14 = vector.load %arg4[%c0_12, %c0_13] : memref<1x32xf32, #tpu.memory_space<vmem>>, vector<1x32xf32>
      %15 = vector.broadcast %14 : vector<1x32xf32> to vector<8x32xf32>
      %16 = arith.addf %13, %15 : vector<8x32xf32>
      %17 = math.tanh %16 : vector<8x32xf32>
      %c0_14 = arith.constant 0 : index
      %c0_15 = arith.constant 0 : index
      %18 = vector.load %arg5[%c0_14, %c0_15] : memref<1x32xf32, #tpu.memory_space<vmem>>, vector<1x32xf32>
      %19 = vector.broadcast %18 : vector<1x32xf32> to vector<8x32xf32>
      %20 = arith.mulf %17, %19 : vector<8x32xf32>
      %cst_16 = arith.constant dense<0.000000e+00> : vector<8xf32>
      %21 = vector.multi_reduction <add>, %20, %cst_16 [1] : vector<8x32xf32> to vector<8xf32>
      %22 = vector.shape_cast %21 : vector<8xf32> to vector<8x1xf32>
      %c0_17 = arith.constant 0 : index
      %23 = memref.load %arg6[%c0_17] : memref<1xf32, #tpu.memory_space<smem>>
      %24 = vector.broadcast %23 : f32 to vector<8x1xf32>
      %25 = arith.addf %22, %24 : vector<8x1xf32>
      %c0_18 = arith.constant 0 : index
      %c0_19 = arith.constant 0 : index
      %26 = vector.load %arg7[%c0_18, %c0_19] : memref<8x1xf32, #tpu.memory_space<vmem>>, vector<8x1xf32>
      tpu.vector_store %arg7[%c0_18, %c0_19], %25 {strides = array<i32>} : memref<8x1xf32, #tpu.memory_space<vmem>>, vector<8x1xf32>,
    } else {
    }
    return
  }
  func.func @transform_0(%arg0: i32, %arg1: i32) -> (i32, i32) {
    %c0_i32 = arith.constant 0 : i32
    return %arg0, %arg1 : i32, i32
  }
  func.func @transform_1(%arg0: i32, %arg1: i32) -> (i32, i32) {
    %c0_i32 = arith.constant 0 : i32
    %c0_i32_0 = arith.constant 0 : i32
    return %arg1, %c0_i32 : i32, i32
  }
  func.func @transform_2(%arg0: i32, %arg1: i32) -> (i32, i32) {
    %c0_i32 = arith.constant 0 : i32
    %c0_i32_0 = arith.constant 0 : i32
    %c0_i32_1 = arith.constant 0 : i32
    return %c0_i32, %c0_i32_0 : i32, i32
  }
  func.func @transform_3(%arg0: i32, %arg1: i32) -> (i32, i32) {
    %c0_i32 = arith.constant 0 : i32
    %c0_i32_0 = arith.constant 0 : i32
    %c0_i32_1 = arith.constant 0 : i32
    return %c0_i32, %c0_i32_0 : i32, i32
  }
  func.func @transform_4(%arg0: i32, %arg1: i32) -> i32 {
    %c0_i32 = arith.constant 0 : i32
    %c0_i32_0 = arith.constant 0 : i32
    return %c0_i32 : i32
  }
  func.func @transform_5(%arg0: i32, %arg1: i32) -> (i32, i32) {
    %c0_i32 = arith.constant 0 : i32
    %c0_i32_0 = arith.constant 0 : i32
    return %arg0, %c0_i32 : i32, i32
  }
}

</mosaic_0001>

<llo_original>
// kernel: tpu_custom_call.1
$region0: #{tpu_custom_call.1}
  #allocation0 [shape = 'u32[]', space=smem, size = 0x4, offset = 0x4, fixed_abs, tag = 'smem constant byte address 0x4 - core index']
  #allocation1 [shape = 'u32[144,128]{1,0:T(1,128)}', space=vmem, size = 0x12000, scoped, tag = 'internal scratch']
  #allocation2 [shape = 'f32[8,32]{1,0:T(8,128)}', space=vmem, size = 0x1000, scoped, tag = 'scratch operand']
  #allocation3 [shape = 'f32[1]{0:T(128)S(6)}', space=smem, size = 0x200, scoped, tag = 'scoped memory for tpu_custom_call.1']
  %s0 = inlined_call_operand.hbm [shape: f32[8,32], index: 0, kind: input, shape index: {}]
  %s1 = inlined_call_operand.hbm [shape: bf16[32,32], index: 1, kind: input, shape index: {}]
  %s2 = inlined_call_operand.vmem [shape: f32[1,32], index: 2, kind: input, shape index: {}]
  %s3 = inlined_call_operand.vmem [shape: f32[1,32], index: 3, kind: input, shape index: {}]
  %s4 = inlined_call_operand.<no memory space> [shape: f32[1], index: 4, kind: input, shape index: {}]
  %s5 = inlined_call_operand.vmem [shape: f32[8,1], index: 5, kind: output, shape index: {}]
  %s6 = sld [smem:[#allocation0]]
  $region46: #{tpu_custom_call.1} parent=0
    _
  %s8 = ssub.s32 1, %s6
  %s9 = scalar_select 0, %s8, %s6
  %10 = sst [smem:[#allocation3]] %s4
  $region1: #{tpu_custom_call.1} parent=0
    #allocation4 [shape = 'u8[4096]{0}', space=vmem, size = 0x1000, scoped, tag = 'input window, operand 0, single buffered']
    #allocation5 [shape = 's32[1]{0}', space=sflag, size = 0x4, scoped, tag = 'scoped memory for tpu_custom_call.1']
    #allocation6 [shape = 'u8[8192]{0}', space=vmem, size = 0x2000, scoped, tag = 'input window, operand 1, single buffered']
    #allocation7 [shape = 's32[1]{0}', space=sflag, size = 0x4, scoped, tag = 'scoped memory for tpu_custom_call.1']
    %11 = vsyncpa [#allocation5], 0
    %12 = vsyncpa [#allocation7], 0
    // Predicated region
    $region2: #{tpu_custom_call.1} parent=1 // pred_check
      _
    $region3: #{tpu_custom_call.1} parent=1 // pred_check_branch
      %14 = sbr.rel (0) target = $region5
    $region4: #{tpu_custom_call.1} parent=1 // pred_region
      %s16 = ssub.s32 128, 128
      %17 = vsyncadd [#allocation5], %s16
      %s19 = sshll.u32 [#allocation4], 4
      %s20 = int_to_ptr.vmem [resolvable:$true] %s19
      %22 = dma.hbm_to_vmem [thread:$0]  %s0, 128, %s20, [#allocation5]
    $region5: #{tpu_custom_call.1} parent=1 // pred_fallthru
      _
    // Predicated region
    $region6: #{tpu_custom_call.1} parent=1 // pred_check
      _
    $region7: #{tpu_custom_call.1} parent=1 // pred_check_branch
      %24 = sbr.rel (0) target = $region9
    $region8: #{tpu_custom_call.1} parent=1 // pred_region
      %s26 = ssub.s32 256, 256
      %27 = vsyncadd [#allocation7], %s26
      %s28 = sshll.u32 [#allocation6], 4
      %s29 = int_to_ptr.vmem [resolvable:$true] %s28
      %34 = dma.hbm_to_vmem [thread:$0]  %s1, 256, %s29, [#allocation7], 64, 64, 4
    $region9: #{tpu_custom_call.1} parent=1 // pred_fallthru
      _
    // Predicated region
    $region10: #{tpu_custom_call.1} parent=1 // pred_check
      _
    $region11: #{tpu_custom_call.1} parent=1 // pred_check_branch
      %36 = sbr.rel (0) target = $region13
    $region12: #{tpu_custom_call.1} parent=1 // pred_region
      _
    $region13: #{tpu_custom_call.1} parent=1 // pred_fallthru
      _
    // Predicated region
    $region14: #{tpu_custom_call.1} parent=1 // pred_check
      _
    $region15: #{tpu_custom_call.1} parent=1 // pred_check_branch
      %38 = sbr.rel (0) target = $region17
    $region16: #{tpu_custom_call.1} parent=1 // pred_region
      _
    $region17: #{tpu_custom_call.1} parent=1 // pred_fallthru
      _
    // Predicated region
    $region18: #{tpu_custom_call.1} parent=1 // pred_check
      _
    $region19: #{tpu_custom_call.1} parent=1 // pred_check_branch
      %40 = sbr.rel (0) target = $region21
    $region20: #{tpu_custom_call.1} parent=1 // pred_region
      _
    $region21: #{tpu_custom_call.1} parent=1 // pred_fallthru
      _
    // Predicated region
    $region22: #{tpu_custom_call.1} parent=1 // pred_check
      _
    $region23: #{tpu_custom_call.1} parent=1 // pred_check_branch
      %42 = sbr.rel (0) target = $region25
    $region24: #{tpu_custom_call.1} parent=1 // pred_region
      %43 = dma.done [#allocation5], 128
    $region25: #{tpu_custom_call.1} parent=1 // pred_fallthru
      _
    // Predicated region
    $region26: #{tpu_custom_call.1} parent=1 // pred_check
      _
    $region27: #{tpu_custom_call.1} parent=1 // pred_check_branch
      %45 = sbr.rel (0) target = $region29
    $region28: #{tpu_custom_call.1} parent=1 // pred_region
      %46 = dma.done [#allocation7], 256
    $region29: #{tpu_custom_call.1} parent=1 // pred_fallthru
      _
    %p48 = scmp.eq.s32.totalorder 0, 0
    // Predicated region
    $region30: #{tpu_custom_call.1} parent=1 // pred_check
      %p49 = pneg %p48
    $region31: #{tpu_custom_call.1} parent=1 // pred_check_branch
      %51 = sbr.rel (%p49) target = $region33
    $region32: #{tpu_custom_call.1} parent=1 // pred_region
      %vm52 = vcmask 261120
      %53 = vst.msk [vmem:[#allocation2] sm:$0xff] %vm52, 0.0
    $region33: #{tpu_custom_call.1} parent=1 // pred_fallthru
      _
    %v54 = vld [vmem:[#allocation2] sm:$0xff]
    %v55 = vld [vmem:[#allocation4] sm:$0xff]
    %v56 = vpack.c.bf16 %v55, %v55
    %v57 = vld [vmem:[#allocation6] sm:$0xf]
    %v58 = vld [vmem:[#allocation6 + $0x4] sm:$0xf]
    %v59 = vld [vmem:[#allocation6 + $0x8] sm:$0xf]
    %v60 = vld [vmem:[#allocation6 + $0xc] sm:$0xf]
    %v65 = vunpack.c.l.b16 %v57
    %v66 = vunpack.c.l.b16 %v58
    %v67 = vunpack.c.l.b16 %v59
    %v68 = vunpack.c.l.b16 %v60
    %v69 = vpack.c.b16 %v66, %v65
    %v70 = vpack.c.b16 %v68, %v67
    %vm73 = vcmask 261120
    %v75 = vsel %vm73, %v56, 0
    %77 = vmatprep.subr.bf16.mxu0 0
    %78 = vmatpush1.bf16.msra.mxu0 0
    %79 = vmatprep.subr.bf16.mxu0 0
    %80 = vmatpush1.bf16.msra.mxu0 0
    %81 = vmatprep.subr.bf16.mxu0 0
    %82 = vmatpush1.bf16.msra.mxu0 0
    %83 = vmatprep.subr.bf16.mxu0 0
    %84 = vmatpush1.bf16.msra.mxu0 0
    %85 = vmatprep.subr.bf16.mxu0 0
    %86 = vmatpush1.bf16.msra.mxu0 0
    %87 = vmatprep.subr.bf16.mxu0 0
    %88 = vmatpush1.bf16.msra.mxu0 0
    %89 = vmatprep.subr.bf16.mxu0 0
    %90 = vmatpush1.bf16.msra.mxu0 %v70
    %91 = vmatprep.subr.bf16.mxu0 0
    %92 = vmatpush1.bf16.msra.mxu0 %v69
    %93 = vmatprep.subr.bf16.mxu0 0
    %94 = vmatpush2.bf16.msra.mxu0 0
    %95 = vmatprep.subr.bf16.mxu0 0
    %96 = vmatpush2.bf16.msra.mxu0 0
    %97 = vmatprep.subr.bf16.mxu0 0
    %98 = vmatpush2.bf16.msra.mxu0 0
    %99 = vmatprep.subr.bf16.mxu0 0
    %100 = vmatpush2.bf16.msra.mxu0 0
    %101 = vmatprep.subr.bf16.mxu0 0
    %102 = vmatpush2.bf16.msra.mxu0 0
    %103 = vmatprep.subr.bf16.mxu0 0
    %104 = vmatpush2.bf16.msra.mxu0 0
    %105 = vmatprep.subr.bf16.mxu0 0
    %106 = vmatpush2.bf16.msra.mxu0 0
    %107 = vmatprep.subr.bf16.mxu0 0
    %108 = vmatpush2.bf16.msra.mxu0 0
    %109 = vmatprep.mubr.bf16.mxu0 0
    %110 = vmatmul.mubr.bf16.gmra.mxu0 %v75
    %v111 = vpop.f32.mrf.mxu0
    %v112 = vadd.f32 0.0, %v111
    %v113 = vpop.f32.mrf.mxu0
    %v114 = vpop.f32.mrf.mxu0
    %v115 = vpop.f32.mrf.mxu0
    %116 = vdwg.mxu0
    %v117 = vadd.f32 %v54, %v112
    %118 = vst.msk [vmem:[#allocation2] sm:$0xff] %vm73, %v117
    // Predicated region
    $region34: #{tpu_custom_call.1} parent=1 // pred_check
      %p119 = pneg %p48
    $region35: #{tpu_custom_call.1} parent=1 // pred_check_branch
      %121 = sbr.rel (%p119) target = $region37
    $region36: #{tpu_custom_call.1} parent=1 // pred_region
      %v122 = vld [vmem:[#allocation2] sm:$0xff]
      %v123 = vld [vmem:[%s2] sm:$0x1]
      %v125 = vlaneseq
      %v126 = vshrl.u32 %v125, 7
      %v127 = vsub.s32 0, %v126
      %v128 = vrot.slane %v123, %v127
      %v130 = vadd.f32 %v122, %v128
      %v131 = vtanh.pop %v130
      %v132 = vld [vmem:[%s3] sm:$0x1]
      %v134 = vlaneseq
      %v135 = vshrl.u32 %v134, 7
      %v136 = vsub.s32 0, %v135
      %v137 = vrot.slane %v132, %v136
      %v139 = vmul.f32 %v131, %v137
      %v140 = vsel %vm73, %v139, 0.0
      %141 = vadd.xlane.f32.xlu0 %v140
      %v142 = vpop.xlane.xlu0 %141
      %s143 = sld [smem:[#allocation3]]
      %v144 = vstv %s143
      %v145 = vadd.f32 %v142, %v144
      %vm146 = vcmask 7168
      %147 = vst.msk [vmem:[%s5] sm:$0xff] %vm146, %v145
    $region37: #{tpu_custom_call.1} parent=1 // pred_fallthru
      _
    // Predicated region
    $region38: #{tpu_custom_call.1} parent=1 // pred_check
      _
    $region39: #{tpu_custom_call.1} parent=1 // pred_check_branch
      %149 = sbr.rel (0) target = $region41
    $region40: #{tpu_custom_call.1} parent=1 // pred_region
      _
    $region41: #{tpu_custom_call.1} parent=1 // pred_fallthru
      _
    // Predicated region
    $region42: #{tpu_custom_call.1} parent=1 // pred_check
      _
    $region43: #{tpu_custom_call.1} parent=1 // pred_check_branch
      %151 = sbr.rel (0) target = $region45
    $region44: #{tpu_custom_call.1} parent=1 // pred_region
      _
    $region45: #{tpu_custom_call.1} parent=1 // pred_fallthru
      _
    %152 = vsyncpa [#allocation5], 1
    %153 = vsyncpa [#allocation7], 1

</llo_original>
